<compile_context>
chip_gen: v7x
topology: tpu7x:2x2x1
jax: 0.10.0
libtpu: 0.0.40
codegen_flags: <defaults>
</compile_context>

<pallas_src>
import functools
import math

import jax
import jax.numpy as jnp
from jax import lax
from jax.experimental import pallas as pl
from jax.experimental.pallas import tpu as pltpu


def _sublane_multiple(dtype) -> int:
    """Native sublane tiling: 8 for 32-bit, 16 for bf16/f16, 32 for 8-bit."""
    return max(8, 32 // jnp.dtype(dtype).itemsize)


def _default_tile_budget_bytes() -> int:
    """Per-tile VMEM budget (Pallas double-buffers the output tile).

    v5e default scoped VMEM is 16 MiB -> 2 x 6 MiB tiles.
    v6e/v7x default scoped VMEM is 32 MiB -> 2 x 8 MiB tiles (v7x has only
    64 MiB physical VMEM, so we stay well under it without vmem_limit_bytes).
    """
    try:
        kind = jax.devices()[0].device_kind.lower()
    except Exception:
        return 6 << 20
    if "v5 lite" in kind or "v5e" in kind or "v5litepod" in kind:
        return 6 << 20
    return 8 << 20


def _const_fill_kernel(mean_ref, o_ref, *, chunk_rows):
    # mean_ref: (1, width) lane-dense mean row, VMEM-resident across all steps.
    # o_ref:    (tile_rows, width) output tile in VMEM.
    tile_rows, width = o_ref.shape
    n_full = tile_rows // chunk_rows
    rem = tile_rows - n_full * chunk_rows

    row = mean_ref[...]                                   # (1, width)

    if n_full > 0:
        # Hoisted broadcast: ~chunk_rows*width elements (~8 vregs) live, total.
        chunk = jnp.broadcast_to(row, (chunk_rows, width))

        def body(c, carry):
            start = pl.multiple_of(c * chunk_rows, chunk_rows)
            o_ref[pl.ds(start, chunk_rows), :] = chunk
            return carry

        lax.fori_loop(0, n_full, body, 0)

    if rem > 0:
        o_ref[pl.ds(n_full * chunk_rows, rem), :] = jnp.broadcast_to(row, (rem, width))


def const_mean_forward(
    x,
    mean,
    *,
    tile_budget_bytes=None,
    target_row_bytes=4096,
    store_chunk_bytes=32 * 1024,
    small_output_bytes=1 << 20,
):
    """Pallas equivalent of constMean.forward.

    Args:
      x:    (N, ...) array; only its leading (batch) dimension is used.
      mean: (output_dim,) parameter vector.

    Returns:
      (N, output_dim) array of dtype mean.dtype.
    """
    n = x.shape[0]
    d = mean.shape[0]
    dtype = mean.dtype
    itemsize = jnp.dtype(dtype).itemsize

    # Degenerate shapes: nothing to materialize.
    if n == 0 or d == 0:
        return jnp.zeros((n, d), dtype=dtype)

    # Tiny outputs: kernel launch + DMA setup dominates; XLA's broadcast is
    # strictly cheaper (and usually fuses lazily into the consumer).
    if n * d * itemsize <= small_output_bytes:
        return jnp.broadcast_to(mean[None, :], (n, d))

    if tile_budget_bytes is None:
        tile_budget_bytes = _default_tile_budget_bytes()

    sublane = _sublane_multiple(dtype)

    # ---- lane-dense, wide slab rows ------------------------------------
    # Smallest row width that is a multiple of both d and 128, then widened
    # to ~target_row_bytes so each DMA row is 4 KiB+ instead of 512 B.
    base = d * 128 // math.gcd(d, 128)                    # lcm(d, 128)
    fold = max(1, (target_row_bytes // itemsize) // base)
    width = fold * base                                   # % 128 == 0
    rows_per_slab_row = width // d                        # whole mean copies per slab row

    n_slab = pl.cdiv(n, rows_per_slab_row)                # slab rows
    n_pad = n_slab * rows_per_slab_row                    # padded output rows
    row_bytes = width * itemsize

    # Mean replicated across one lane-dense slab row (tiny, built on XLA side).
    mean_row = jnp.tile(mean, rows_per_slab_row).reshape(1, width)

    # ---- row-tile sizing: as big as the double-buffered VMEM budget allows
    max_tile_rows = max(sublane, (tile_budget_bytes // (2 * row_bytes)) // sublane * sublane)

    if n_slab <= max_tile_rows:
        tile_rows = n_slab                                # full extent: always a legal block
        grid_rows = 1
        # Give v7x's second TensorCore work when the single tile is big enough
        # that one extra grid step (~0.35 us) is negligible.  No-op on v5e/v6e.
        if n_slab >= 2 * sublane and n_slab * row_bytes >= (2 << 20):
            half = pl.cdiv(n_slab, 2)
            tile_rows = pl.cdiv(half, sublane) * sublane
            grid_rows = pl.cdiv(n_slab, tile_rows)
    else:
        tile_rows = max_tile_rows
        grid_rows = pl.cdiv(n_slab, tile_rows)            # last block is an edge block

    # ---- in-kernel store chunking: cap live vregs (~store_chunk_bytes)
    chunk_rows = max(sublane, (store_chunk_bytes // row_bytes) // sublane * sublane)
    chunk_rows = min(chunk_rows, tile_rows)

    kernel = functools.partial(_const_fill_kernel, chunk_rows=chunk_rows)

    out_bytes = n_slab * row_bytes

    out = pl.pallas_call(
        kernel,
        out_shape=jax.ShapeDtypeStruct((n_slab, width), dtype),
        grid=(grid_rows,),
        in_specs=[
            # Same block index every step -> mean_row stays resident in VMEM.
            pl.BlockSpec((1, width), lambda i: (0, 0)),
        ],
        out_specs=pl.BlockSpec((tile_rows, width), lambda i: (i, 0)),
        compiler_params=pltpu.CompilerParams(
            dimension_semantics=("parallel",),
        ),
        cost_estimate=pl.CostEstimate(
            flops=0, transcendentals=0, bytes_accessed=out_bytes + row_bytes
        ),
    )(mean_row)

    # (n_slab, width) row-major == (n_pad, d) row-major.
    out = out.reshape(n_pad, d)
    if n_pad != n:
        out = out[:n]
    return out


if __name__ == "__main__":
    key = jax.random.PRNGKey(0)

    # Small demo consistent with the module: batch=2, input_dim=16, output_dim=32.
    batch, input_dim, output_dim = 2, 16, 32
    x = jax.random.normal(key, (batch, input_dim), dtype=jnp.float32)
    mean = jnp.zeros((output_dim,), dtype=jnp.float32)    # nn.Parameter(torch.zeros(D))

    out = jax.block_until_ready(const_mean_forward(x, mean))
    ref = jnp.broadcast_to(mean[None, :], (batch, output_dim))
    assert out.shape == (batch, output_dim), out.shape
    assert out.dtype == jnp.float32, out.dtype
    assert bool(jnp.array_equal(out, ref)), "mismatch vs reference broadcast (small case)"

    # Larger case that exercises the Pallas kernel path (output > 1 MiB), with a
    # non-trivial mean and N not a multiple of rows-per-slab-row (tests the
    # lane-dense fold, padding, multi-tile grid and edge block).
    mean2 = jax.random.normal(jax.random.PRNGKey(1), (output_dim,), dtype=jnp.float32)
    n_big = 16390
    x2 = jnp.zeros((n_big, input_dim), dtype=jnp.float32)
    out2 = jax.block_until_ready(const_mean_forward(x2, mean2))
    ref2 = jnp.broadcast_to(mean2[None, :], (n_big, output_dim))
    assert out2.shape == ref2.shape, out2.shape
    assert bool(jnp.array_equal(out2, ref2)), "mismatch vs reference broadcast (tiled case)"

    print("KERNEL_OK")
</pallas_src>

<mosaic_0001>
module attributes {stable_mosaic.version = 11 : i64} {
  func.func @_const_fill_kernel(%arg0: i32, %arg1: memref<1x1024xf32, #tpu.memory_space<vmem>>, %arg2: memref<264x1024xf32, #tpu.memory_space<vmem>>) attributes {dimension_semantics = [#tpu.dimension_semantics<parallel>], iteration_bounds = array<i64: 2>, scalar_prefetch = 0 : i64, scratch_operands = 0 : i64, tpu.core_type = #tpu.core_type<tc>, window_params = [{pipeline_mode = #tpu.pipeline_mode<synchronous>, transform_indices = @transform_0, window_bounds = array<i64: 1, 1024>}, {transform_indices = @transform_1, window_bounds = array<i64: 264, 1024>}]} {
    %c0 = arith.constant 0 : index
    %c0_0 = arith.constant 0 : index
    %0 = vector.load %arg1[%c0, %c0_0] : memref<1x1024xf32, #tpu.memory_space<vmem>>, vector<1x1024xf32>
    %1 = vector.shape_cast %0 : vector<1x1024xf32> to vector<1x1024xf32>
    %2 = vector.broadcast %1 : vector<1x1024xf32> to vector<8x1024xf32>
    %c0_i32 = arith.constant 0 : i32
    %c33_i32 = arith.constant 33 : i32
    %3 = arith.addi %c0_i32, %c33_i32 : i32
    %c1_i32 = arith.constant 1 : i32
    scf.for %arg3 = %c0_i32 to %3 step %c1_i32  : i32 {
      %c8_i32 = arith.constant 8 : i32
      %4 = arith.muli %arg3, %c8_i32 : i32
      %5 = tpu.assume_multiple %4, 8 : i32
      %6 = arith.index_cast %5 : i32 to index
      %c0_2 = arith.constant 0 : index
      %7 = vector.load %arg2[%6, %c0_2] : memref<264x1024xf32, #tpu.memory_space<vmem>>, vector<8x1024xf32>
      tpu.vector_store %arg2[%6, %c0_2], %2 {strides = array<i32>} : memref<264x1024xf32, #tpu.memory_space<vmem>>, vector<8x1024xf32>,
    }
    %c33_i32_1 = arith.constant 33 : i32
    return
  }
  func.func @transform_0(%arg0: i32) -> (i32, i32) {
    %c0_i32 = arith.constant 0 : i32
    %c0_i32_0 = arith.constant 0 : i32
    %c0_i32_1 = arith.constant 0 : i32
    return %c0_i32, %c0_i32_0 : i32, i32
  }
  func.func @transform_1(%arg0: i32) -> (i32, i32) {
    %c0_i32 = arith.constant 0 : i32
    %c0_i32_0 = arith.constant 0 : i32
    return %arg0, %c0_i32 : i32, i32
  }
}

</mosaic_0001>

<llo_original>
// kernel: tpu_custom_call.1
$region0: #{tpu_custom_call.1}
  #allocation0 [shape = 'u32[]', space=smem, size = 0x4, offset = 0x4, fixed_abs, tag = 'smem constant byte address 0x4 - core index']
  #allocation1 [shape = 'u32[144,128]{1,0:T(1,128)}', space=vmem, size = 0x12000, scoped, tag = 'internal scratch']
  %s0 = inlined_call_operand.hbm [shape: f32[1,1024], index: 0, kind: input, shape index: {}]
  %s1 = inlined_call_operand.hbm [shape: f32[513,1024], index: 1, kind: output, shape index: {}]
  %s2 = sld [smem:[#allocation0]]
  $region48: #{tpu_custom_call.1} parent=0
    _
  %s4 = ssub.s32 1, %s2
  %s5 = scalar_select 0, %s4, %s2
  $region1: #{tpu_custom_call.1} parent=0
    #allocation2 [shape = 'u8[4096]{0}', space=vmem, size = 0x1000, scoped, tag = 'input window, operand 0, single buffered']
    #allocation3 [shape = 's32[2]{0}', space=sflag, size = 0x8, scoped, tag = 'scoped memory for tpu_custom_call.1']
    #allocation4 [shape = 's32[2]{0}', space=sflag, size = 0x8, scoped, tag = 'scoped memory for tpu_custom_call.1']
    #allocation5 [shape = 'u8[2162688]{0}', space=vmem, size = 0x210000, scoped, tag = 'output window, operand 0']
    %6 = vsyncpa [#allocation3], 0
    %7 = vsyncpa [#allocation4], 0
    %s8 = scalar_lea.sflag [#allocation4], 1
    %9 = vsyncpa %s8, 0
    loop: start=0, step=1, limit=4
    $region2: #{tpu_custom_call.1} parent=1 // loop_pre_header
      _
    $region3: #{tpu_custom_call.1} parent=1 // loop_header
      %s11 = sphi 0, %s15
      %p12 = scmp.ge.s32.totalorder %s11, 4
      %s19 = sphi 0, %s19
      %s21 = sphi 0, %s19
      %s22 = sphi 0, %s21
      %s36 = sphi 0, %s22
      %s42 = sphi 0, %s44
      %s45 = sphi 0, %s42
      %s46 = sphi 0, %s45
      %s62 = sphi 0, %s46
    $region4: #{tpu_custom_call.1} parent=1 // loop_header_branch
      %14 = sbr.rel (%p12) target = $region8
    $region5: #{tpu_custom_call.1} parent=1 // loop_body
      %s16 = ssub.s32 %s11, 1
      %s17 = ssub.s32 %s11, 2
      %s18 = sadd.s32 %s11, 1
      %s20 = sadd.s32 %s19, 1
      %p23 = scmp.eq.s32.totalorder %s11, 1
      %p24 = scmp.ne.s32.totalorder %s19, %s21
      %p25 = scmp.eq.s32.totalorder %s11, 0
      %p26 = por %p24, %p25
      %p27 = scmp.ne.s32.totalorder %s19, %s21
      %p28 = scmp.eq.s32.totalorder %s16, 1
      %p29 = por %p27, %p28
      %p30 = scmp.ne.s32.totalorder %s21, %s22
      %p31 = scmp.eq.s32.totalorder %s16, 0
      %p32 = por %p30, %p31
      %p33 = scmp.ne.s32.totalorder %s21, %s22
      %p34 = scmp.eq.s32.totalorder %s17, 1
      %p35 = por %p33, %p34
      %p37 = scmp.ne.s32.totalorder %s22, %s36
      %p38 = scmp.eq.s32.totalorder %s17, 0
      %p39 = por %p37, %p38
      %s40 = ssub.s32 %s11, %s18
      %p41 = scmp.eq.s32.totalorder %s40, 0
      %s43 = sadd.s32 %s42, 1
      %s44 = scalar_select %p41, %s42, %s43
      %p47 = pneg %p41
      %p48 = scmp.eq.s32.totalorder %s11, 1
      %p49 = por %p47, %p48
      %p50 = scmp.ne.s32.totalorder %s42, %s45
      %p51 = scmp.eq.s32.totalorder %s11, 0
      %p52 = por %p50, %p51
      %p53 = scmp.ne.s32.totalorder %s42, %s45
      %p54 = scmp.eq.s32.totalorder %s16, 1
      %p55 = por %p53, %p54
      %p56 = scmp.ne.s32.totalorder %s45, %s46
      %p57 = scmp.eq.s32.totalorder %s16, 0
      %p58 = por %p56, %p57
      %p59 = scmp.ne.s32.totalorder %s45, %s46
      %p60 = scmp.eq.s32.totalorder %s17, 1
      %p61 = por %p59, %p60
      %p63 = scmp.ne.s32.totalorder %s46, %s62
      %p64 = scmp.eq.s32.totalorder %s17, 0
      %p65 = por %p63, %p64
      %p66 = scmp.le.s32.totalorder 1, %s11
      %p67 = scmp.lt.s32.totalorder %s11, 3
      %p68 = pnand %p66, %p67
      %p69 = pneg %p68
      // Predicated region
      $region9: #{tpu_custom_call.1} parent=5 // pred_check
        _
      $region10: #{tpu_custom_call.1} parent=5 // pred_check_branch
        %71 = sbr.rel (%p68) target = $region12
      $region11: #{tpu_custom_call.1} parent=5 // pred_region
        %s72 = ssub.s32 %s11, 1
        // Predicated region
        $region13: #{tpu_custom_call.1} parent=11 // pred_check
          %p73 = pneg %p32
        $region14: #{tpu_custom_call.1} parent=11 // pred_check_branch
          %75 = sbr.rel (%p73) target = $region16
        $region15: #{tpu_custom_call.1} parent=11 // pred_region
          %s77 = ssub.s32 128, 128
          %78 = vsyncadd [#allocation3], %s77
          %s80 = sshll.u32 [#allocation2], 4
          %s81 = int_to_ptr.vmem [resolvable:$true] %s80
          %83 = dma.hbm_to_vmem [thread:$0]  %s0, 128, %s81, [#allocation3]
        $region16: #{tpu_custom_call.1} parent=11 // pred_fallthru
          _
      $region12: #{tpu_custom_call.1} parent=5 // pred_fallthru
        _
      %p84 = scmp.lt.s32.totalorder %s11, 2
      // Predicated region
      $region17: #{tpu_custom_call.1} parent=5 // pred_check
        %p85 = pneg %p84
      $region18: #{tpu_custom_call.1} parent=5 // pred_check_branch
        %87 = sbr.rel (%p85) target = $region20
      $region19: #{tpu_custom_call.1} parent=5 // pred_region
        _
      $region20: #{tpu_custom_call.1} parent=5 // pred_fallthru
        _
      %p88 = scmp.le.s32.totalorder 1, %s11
      %p89 = scmp.lt.s32.totalorder %s11, 3
      %p90 = pnand %p88, %p89
      %p91 = pneg %p90
      // Predicated region
      $region21: #{tpu_custom_call.1} parent=5 // pred_check
        _
      $region22: #{tpu_custom_call.1} parent=5 // pred_check_branch
        %93 = sbr.rel (%p90) target = $region24
      $region23: #{tpu_custom_call.1} parent=5 // pred_region
        %s94 = ssub.s32 %s11, 1
        // Predicated region
        $region25: #{tpu_custom_call.1} parent=23 // pred_check
          %p95 = pneg %p32
        $region26: #{tpu_custom_call.1} parent=23 // pred_check_branch
          %97 = sbr.rel (%p95) target = $region28
        $region27: #{tpu_custom_call.1} parent=23 // pred_region
          %98 = dma.done [#allocation3], 128
        $region28: #{tpu_custom_call.1} parent=23 // pred_fallthru
          _
        %p99 = pneg %p32
        %p100 = pneg %p29
        %p101 = pneg %p58
        %p102 = pneg %p55
        %s103 = sand.u32 %s45, 1
        %s104 = scalar_lea.sflag [#allocation4], %s103
        %s105 = sand.u32 %s45, 1
        %s106 = smul.addr %s105, 2112
        %s107 = scalar_lea.vmem [#allocation5], %s106
        %s108 = smul.u32 33, %s16
        %s109 = ssub.s32 65, %s108
        %p110 = scmp.lt.s32.totalorder %s109, 33
        %s111 = scalar_select %p110, %s109, 33
        %s112 = smul.u32 128, %s111
        %s113 = smul.u32 %s112, 8
        %v114 = vld [vmem:[#allocation2] sm:$0xff]
        %v116 = vlaneseq
        %v117 = vshrl.u32 %v116, 7
        %v118 = vsub.s32 0, %v117
        %v119 = vrot.slane %v114, %v118
        %v120 = vlaneseq
        %v121 = vshrl.u32 %v120, 7
        %v122 = vsub.s32 1, %v121
        %v123 = vrot.slane %v114, %v122
        %v124 = vlaneseq
        %v125 = vshrl.u32 %v124, 7
        %v126 = vsub.s32 2, %v125
        %v127 = vrot.slane %v114, %v126
        %v128 = vlaneseq
        %v129 = vshrl.u32 %v128, 7
        %v130 = vsub.s32 3, %v129
        %v131 = vrot.slane %v114, %v130
        %v132 = vlaneseq
        %v133 = vshrl.u32 %v132, 7
        %v134 = vsub.s32 4, %v133
        %v135 = vrot.slane %v114, %v134
        %v136 = vlaneseq
        %v137 = vshrl.u32 %v136, 7
        %v138 = vsub.s32 5, %v137
        %v139 = vrot.slane %v114, %v138
        %v140 = vlaneseq
        %v141 = vshrl.u32 %v140, 7
        %v142 = vsub.s32 6, %v141
        %v143 = vrot.slane %v114, %v142
        %v144 = vlaneseq
        %v145 = vshrl.u32 %v144, 7
        %v146 = vsub.s32 7, %v145
        %v147 = vrot.slane %v114, %v146
        loop: start=0, step=1, limit=33
        $region29: #{tpu_custom_call.1} parent=23 // loop_pre_header
          _
        $region30: #{tpu_custom_call.1} parent=23 // loop_header
          %s157 = sphi 0, %s161
          %p158 = scmp.ge.s32.totalorder %s157, 33
        $region31: #{tpu_custom_call.1} parent=23 // loop_header_branch
          %160 = sbr.rel (%p158) target = $region35
        $region32: #{tpu_custom_call.1} parent=23 // loop_body
          %s162 = smul.u32 %s157, 8
          %s163 = sshra.s32 %s162, 3
          %s164 = sand.u32 %s162, 7
          %s165 = smul.u32 %s163, 8
          %s166 = smul.addr %s165, 8
          %s167 = scalar_lea.vmem %s107, %s166 [#allocation5]
          %168 = vst [vmem:[%s167] sm:$0xff] %v119
          %169 = vst [vmem:[%s167 + $0x8] sm:$0xff] %v123
          %170 = vst [vmem:[%s167 + $0x10] sm:$0xff] %v127
          %171 = vst [vmem:[%s167 + $0x18] sm:$0xff] %v131
          %172 = vst [vmem:[%s167 + $0x20] sm:$0xff] %v135
          %173 = vst [vmem:[%s167 + $0x28] sm:$0xff] %v139
          %174 = vst [vmem:[%s167 + $0x30] sm:$0xff] %v143
          %175 = vst [vmem:[%s167 + $0x38] sm:$0xff] %v147
        $region33: #{tpu_custom_call.1} parent=23 // loop_footer
          %s161 = sadd.s32 1, %s157
        $region34: #{tpu_custom_call.1} parent=23 // loop_footer_branch
          %156 = sbr.rel target = $region30
        $region35: #{tpu_custom_call.1} parent=23 // loop_exit
          _
        %s176 = sand.u32 %s45, 1
        %s177 = scalar_lea.sflag [#allocation4], %s176
        %s178 = sand.u32 %s45, 1
        %s179 = smul.addr %s178, 2112
        %s180 = scalar_lea.vmem [#allocation5], %s179
        // Predicated region
        $region36: #{tpu_custom_call.1} parent=23 // pred_check
          %p181 = pneg %p55
        $region37: #{tpu_custom_call.1} parent=23 // pred_check_branch
          %183 = sbr.rel (%p181) target = $region39
        $region38: #{tpu_custom_call.1} parent=23 // pred_region
          %s184 = smul.u32 33, %s16
          %s185 = ssub.s32 65, %s184
          %p186 = scmp.lt.s32.totalorder %s185, 33
          %s187 = scalar_select %p186, %s185, 33
          %s188 = smul.u32 128, %s187
          %s189 = smul.u32 %s188, 8
          %s191 = ssub.s32 33792, %s189
          %192 = vsyncadd %s177, %s191
          %p193 = scmp.ne.s32.totalorder 0, %s189
          %s194 = smul.addr %s184, 8
          %s195 = smul.addr %s194, 128
          %s196 = scalar_lea.hbm %s1, %s195
          %s197 = smul.u32 64, %s187
          %s198 = sshll.u32 %s180, 4
          %s199 = int_to_ptr.vmem [resolvable:$true] %s198
          %s200 = sshll.u32 %s197, 4
          %204 = dma.vmem_to_hbm [thread:$0]  (%p193), %s199, %s200, %s196, %s177, 1024, 1024, 64
        $region39: #{tpu_custom_call.1} parent=23 // pred_fallthru
          _
      $region24: #{tpu_custom_call.1} parent=5 // pred_fallthru
        _
      %p205 = scmp.le.s32.totalorder 2, %s11
      // Predicated region
      $region40: #{tpu_custom_call.1} parent=5 // pred_check
        %p206 = pneg %p205
      $region41: #{tpu_custom_call.1} parent=5 // pred_check_branch
        %208 = sbr.rel (%p206) target = $region43
      $region42: #{tpu_custom_call.1} parent=5 // pred_region
        %s209 = ssub.s32 %s11, 2
        // Predicated region
        $region44: #{tpu_custom_call.1} parent=42 // pred_check
          %p210 = pneg %p61
        $region45: #{tpu_custom_call.1} parent=42 // pred_check_branch
          %212 = sbr.rel (%p210) target = $region47
        $region46: #{tpu_custom_call.1} parent=42 // pred_region
          %s213 = sand.u32 %s46, 1
          %s214 = scalar_lea.sflag [#allocation4], %s213
          %s215 = sand.u32 %s46, 1
          %s216 = smul.addr %s215, 2112
          %s217 = scalar_lea.vmem [#allocation5], %s216
          %218 = dma.done %s214, 33792
        $region47: #{tpu_custom_call.1} parent=42 // pred_fallthru
          _
      $region43: #{tpu_custom_call.1} parent=5 // pred_fallthru
        _
    $region6: #{tpu_custom_call.1} parent=1 // loop_footer
      %s15 = sadd.s32 1, %s11
    $region7: #{tpu_custom_call.1} parent=1 // loop_footer_branch
      %10 = sbr.rel target = $region3
    $region8: #{tpu_custom_call.1} parent=1 // loop_exit
      _
    %219 = vsyncpa [#allocation3], 1
    %s220 = scalar_lea.sflag [#allocation3], 1
    %221 = vsyncpa %s220, 1
    %222 = vsyncpa [#allocation4], 1
    %s223 = scalar_lea.sflag [#allocation4], 1
    %224 = vsyncpa %s223, 1

</llo_original>
